<compile_context>
chip_gen: v7x
topology: tpu7x:2x2x1
jax: 0.10.0
libtpu: 0.0.40
codegen_flags: <defaults>
</compile_context>

<pallas_src>
import functools

import jax
import jax.numpy as jnp
from jax.experimental import pallas as pl
from jax.experimental.pallas import tpu as pltpu

EPS = 1e-16


# -----------------------------------------------------------------------------
# Fast path: a whole (bm, N, K) slab of batch rows fits in VMEM.
# -----------------------------------------------------------------------------
def _gln_fused_kernel(y_ref, gamma_ref, beta_ref, o_ref, *, inv_count):
    # Pass 1: mean.  Reduce the lane axis (K) first (XLU), then the tiny
    # channel axis; f32 accumulation regardless of the input dtype.
    row_sum = jnp.sum(y_ref[...], axis=2, keepdims=True, dtype=jnp.float32)  # (bm,N,1)
    mean = jnp.sum(row_sum, axis=1, keepdims=True) * inv_count               # (bm,1,1)

    # Pass 2: two-pass variance (numerically safe vs E[x^2]-mean^2); the block
    # is VMEM-resident so this extra sweep hides under the HBM bound.
    d = y_ref[...].astype(jnp.float32) - mean
    row_sq = jnp.sum(d * d, axis=2, keepdims=True)                           # (bm,N,1)
    var = jnp.sum(row_sq, axis=1, keepdims=True) * inv_count                 # (bm,1,1)
    inv_std = jax.lax.rsqrt(var + EPS)

    # Fold gamma/beta/mean/inv_std into scale & shift on tiny (bm,N,1) tensors,
    # then one multiply-add sweep that re-reads y_ref (no block-sized f32 temp
    # kept alive across the stats and normalize passes).
    gamma = gamma_ref[...].astype(jnp.float32)[None]                         # (1,N,1)
    beta = beta_ref[...].astype(jnp.float32)[None]                           # (1,N,1)
    scale = gamma * inv_std                                                  # (bm,N,1)
    shift = beta - mean * scale
    # TODO(synk): for bf16 inputs on v6e/v7x the normalize sweep could stay in
    # bf16 (halves vld/vst traffic); kept f32 here to match reference numerics
    # on all chips (v5e has no bf16 VPU).
    o_ref[...] = (y_ref[...].astype(jnp.float32) * scale + shift).astype(o_ref.dtype)


# -----------------------------------------------------------------------------
# Fallback path: a single batch row does not fit in the VMEM block budget.
# Two phases: (1) accumulate per-(row, channel) sum / sum-of-squares over K
# tiles, (2) normalize tile-by-tile.  Costs one extra HBM read of y but stays
# pipelined and within VMEM.
# -----------------------------------------------------------------------------
def _gln_stats_kernel(y_ref, csum_ref, csq_ref, *, k_orig, tk):
    k = pl.program_id(1)

    @pl.when(k == 0)
    def _():
        csum_ref[...] = jnp.zeros_like(csum_ref)
        csq_ref[...] = jnp.zeros_like(csq_ref)

    y = y_ref[...].astype(jnp.float32)                                       # (1,N,tk)
    if k_orig % tk:
        # Ragged last K tile: zero the out-of-range lanes before accumulating.
        col = jax.lax.broadcasted_iota(jnp.int32, y.shape, 2) + k * tk
        y = jnp.where(col < k_orig, y, 0.0)
    csum_ref[...] += jnp.sum(y, axis=2, keepdims=True)                       # (1,N,1)
    csq_ref[...] += jnp.sum(y * y, axis=2, keepdims=True)                    # (1,N,1)


def _gln_norm_kernel(y_ref, csum_ref, csq_ref, gamma_ref, beta_ref, o_ref, *,
                     inv_count):
    s = jnp.sum(csum_ref[...], axis=1, keepdims=True)                        # (1,1,1)
    sq = jnp.sum(csq_ref[...], axis=1, keepdims=True)                        # (1,1,1)
    mean = s * inv_count
    var = jnp.maximum(sq * inv_count - mean * mean, 0.0)
    inv_std = jax.lax.rsqrt(var + EPS)
    gamma = gamma_ref[...].astype(jnp.float32)[None]                         # (1,N,1)
    beta = beta_ref[...].astype(jnp.float32)[None]
    scale = gamma * inv_std
    shift = beta - mean * scale
    o_ref[...] = (y_ref[...].astype(jnp.float32) * scale + shift).astype(o_ref.dtype)
    # (OOB lanes of a ragged last K tile are written with garbage but the store
    # is masked by Pallas, so they never reach HBM.)


# -----------------------------------------------------------------------------
# Wrapper
# -----------------------------------------------------------------------------
def _vmem_limits():
    """Generation-aware compiler VMEM limit and per-block sizing budget."""
    try:
        cap = int(pltpu.get_tpu_info().vmem_capacity_bytes)
    except Exception:
        cap = 64 * 1024 * 1024            # conservative: v7x per-TC VMEM
    vmem_limit = min((cap * 3) // 4, 96 * 1024 * 1024)   # 96 MiB on v5e/v6e, 48 MiB on v7x
    block_budget = vmem_limit // 2        # double-buffered in+out + f32 temps
    return vmem_limit, block_budget


def global_layer_norm_1d(y, gamma, beta, *, force_k_tiled=False, k_tile=None):
    """gLN forward.  y: [M, N, K]; gamma, beta: [1, N, 1] (PyTorch param shape)."""
    M, N, K = y.shape
    gamma2d = gamma.reshape(N, 1)          # drop the leading broadcast dim
    beta2d = beta.reshape(N, 1)
    inv_count = 1.0 / (N * K)
    itemsize = jnp.dtype(y.dtype).itemsize
    vmem_limit, block_budget = _vmem_limits()

    # Per-grid-step bytes for one batch row: double-buffered in+out blocks in
    # the native dtype plus ~2 block-sized f32 temps inside the kernel body.
    per_row_bytes = N * K * (4 * itemsize + 8)

    if not force_k_tiled and per_row_bytes <= block_budget:
        # ---------------- fused single-sweep path ----------------
        bm_vmem = max(1, block_budget // per_row_bytes)
        # Keep at least min(M, 8) grid steps so BlockSpec double-buffering has
        # work to overlap and the "parallel" axis shards across both v7x TCs.
        target_steps = min(M, 8)
        bm = max(1, min(bm_vmem, pl.cdiv(M, target_steps)))
        grid_m = pl.cdiv(M, bm)

        kernel = functools.partial(_gln_fused_kernel, inv_count=inv_count)
        return pl.pallas_call(
            kernel,
            out_shape=jax.ShapeDtypeStruct((M, N, K), y.dtype),
            grid=(grid_m,),
            in_specs=[
                pl.BlockSpec((bm, N, K), lambda i: (i, 0, 0)),
                pl.BlockSpec((N, 1), lambda i: (0, 0)),    # resident params
                pl.BlockSpec((N, 1), lambda i: (0, 0)),
            ],
            out_specs=pl.BlockSpec((bm, N, K), lambda i: (i, 0, 0)),
            compiler_params=pltpu.CompilerParams(
                dimension_semantics=("parallel",),
                vmem_limit_bytes=vmem_limit,
            ),
        )(y, gamma2d, beta2d)

    # ---------------- K-tiled two-phase fallback ----------------
    if k_tile is not None:
        tk = int(k_tile)                   # must be a multiple of 128 (or >= K)
    else:
        bytes_per_col = N * (4 * itemsize + 8)
        tk = max(128, ((block_budget // max(bytes_per_col, 1)) // 128) * 128)
        # TODO(synk): if even a (1, N, 128) column slab exceeds VMEM (huge N),
        # the channel axis would also need tiling.
    if tk >= K:
        tk = K
    grid_k = pl.cdiv(K, tk)

    stats_kernel = functools.partial(_gln_stats_kernel, k_orig=K, tk=tk)
    csum, csq = pl.pallas_call(
        stats_kernel,
        out_shape=(
            jax.ShapeDtypeStruct((M, N, 1), jnp.float32),
            jax.ShapeDtypeStruct((M, N, 1), jnp.float32),
        ),
        grid=(M, grid_k),
        in_specs=[pl.BlockSpec((1, N, tk), lambda i, k: (i, 0, k))],
        out_specs=(
            pl.BlockSpec((1, N, 1), lambda i, k: (i, 0, 0)),
            pl.BlockSpec((1, N, 1), lambda i, k: (i, 0, 0)),
        ),
        compiler_params=pltpu.CompilerParams(
            dimension_semantics=("parallel", "arbitrary"),
            vmem_limit_bytes=vmem_limit,
        ),
    )(y)

    norm_kernel = functools.partial(_gln_norm_kernel, inv_count=inv_count)
    return pl.pallas_call(
        norm_kernel,
        out_shape=jax.ShapeDtypeStruct((M, N, K), y.dtype),
        grid=(M, grid_k),
        in_specs=[
            pl.BlockSpec((1, N, tk), lambda i, k: (i, 0, k)),
            pl.BlockSpec((1, N, 1), lambda i, k: (i, 0, 0)),
            pl.BlockSpec((1, N, 1), lambda i, k: (i, 0, 0)),
            pl.BlockSpec((N, 1), lambda i, k: (0, 0)),
            pl.BlockSpec((N, 1), lambda i, k: (0, 0)),
        ],
        out_specs=pl.BlockSpec((1, N, tk), lambda i, k: (i, 0, k)),
        compiler_params=pltpu.CompilerParams(
            dimension_semantics=("parallel", "arbitrary"),
            vmem_limit_bytes=vmem_limit,
        ),
    )(y, csum, csq, gamma2d, beta2d)


def _reference(y, gamma, beta):
    mean = jnp.mean(jnp.mean(y, axis=1, keepdims=True), axis=2, keepdims=True)
    var = jnp.mean(
        jnp.mean((y - mean) ** 2, axis=1, keepdims=True), axis=2, keepdims=True
    )
    return gamma * (y - mean) / jnp.power(var + EPS, 0.5) + beta


if __name__ == "__main__":
    M, N, K = 2, 4, 16  # batch, channels, length
    key = jax.random.PRNGKey(0)
    k0, k1 = jax.random.split(key)
    y = jax.random.normal(k0, (M, N, K), dtype=jnp.float32)

    # Deterministic parameter init matching reset_parameters(): gamma=1, beta=0.
    gamma = jnp.ones((1, N, 1), dtype=jnp.float32)
    beta = jnp.zeros((1, N, 1), dtype=jnp.float32)

    out = jax.block_until_ready(global_layer_norm_1d(y, gamma, beta))
    ref = _reference(y, gamma, beta)
    assert out.shape == (M, N, K)
    assert jnp.allclose(out, ref, atol=1e-5, rtol=1e-5)

    # Also exercise the K-tiled two-phase fallback with a ragged last K tile.
    K2 = 160
    y2 = jax.random.normal(k1, (M, N, K2), dtype=jnp.float32)
    out2 = jax.block_until_ready(
        global_layer_norm_1d(y2, gamma, beta, force_k_tiled=True, k_tile=128)
    )
    ref2 = _reference(y2, gamma, beta)
    assert out2.shape == (M, N, K2)
    assert jnp.allclose(out2, ref2, atol=1e-5, rtol=1e-5)

    print("KERNEL_OK")
</pallas_src>

<mosaic_0001>
module attributes {stable_mosaic.version = 11 : i64} {
  func.func @_gln_fused_kernel(%arg0: i32, %arg1: memref<1x4x16xf32, #tpu.memory_space<vmem>>, %arg2: memref<4x1xf32, #tpu.memory_space<vmem>>, %arg3: memref<4x1xf32, #tpu.memory_space<vmem>>, %arg4: memref<1x4x16xf32, #tpu.memory_space<vmem>>) attributes {dimension_semantics = [#tpu.dimension_semantics<parallel>], iteration_bounds = array<i64: 2>, scalar_prefetch = 0 : i64, scratch_operands = 0 : i64, tpu.core_type = #tpu.core_type<tc>, window_params = [{transform_indices = @transform_0, window_bounds = array<i64: 1, 4, 16>}, {pipeline_mode = #tpu.pipeline_mode<synchronous>, transform_indices = @transform_1, window_bounds = array<i64: 4, 1>}, {pipeline_mode = #tpu.pipeline_mode<synchronous>, transform_indices = @transform_2, window_bounds = array<i64: 4, 1>}, {transform_indices = @transform_3, window_bounds = array<i64: 1, 4, 16>}]} {
    %c0 = arith.constant 0 : index
    %c0_0 = arith.constant 0 : index
    %c0_1 = arith.constant 0 : index
    %0 = vector.load %arg1[%c0, %c0_0, %c0_1] : memref<1x4x16xf32, #tpu.memory_space<vmem>>, vector<1x4x16xf32>
    %cst = arith.constant dense<0.000000e+00> : vector<1x4xf32>
    %1 = vector.multi_reduction <add>, %0, %cst [2] : vector<1x4x16xf32> to vector<1x4xf32>
    %2 = vector.shape_cast %1 : vector<1x4xf32> to vector<1x4x1xf32>
    %cst_2 = arith.constant dense<0.000000e+00> : vector<1x1xf32>
    %3 = vector.multi_reduction <add>, %2, %cst_2 [1] : vector<1x4x1xf32> to vector<1x1xf32>
    %4 = vector.shape_cast %3 : vector<1x1xf32> to vector<1x1x1xf32>
    %cst_3 = arith.constant 1.562500e-02 : f32
    %5 = vector.broadcast %cst_3 : f32 to vector<1x1x1xf32>
    %6 = arith.mulf %4, %5 : vector<1x1x1xf32>
    %c0_4 = arith.constant 0 : index
    %c0_5 = arith.constant 0 : index
    %c0_6 = arith.constant 0 : index
    %7 = vector.load %arg1[%c0_4, %c0_5, %c0_6] : memref<1x4x16xf32, #tpu.memory_space<vmem>>, vector<1x4x16xf32>
    %8 = vector.broadcast %6 : vector<1x1x1xf32> to vector<1x4x16xf32>
    %9 = arith.subf %7, %8 : vector<1x4x16xf32>
    %10 = arith.mulf %9, %9 : vector<1x4x16xf32>
    %cst_7 = arith.constant dense<0.000000e+00> : vector<1x4xf32>
    %11 = vector.multi_reduction <add>, %10, %cst_7 [2] : vector<1x4x16xf32> to vector<1x4xf32>
    %12 = vector.shape_cast %11 : vector<1x4xf32> to vector<1x4x1xf32>
    %cst_8 = arith.constant dense<0.000000e+00> : vector<1x1xf32>
    %13 = vector.multi_reduction <add>, %12, %cst_8 [1] : vector<1x4x1xf32> to vector<1x1xf32>
    %14 = vector.shape_cast %13 : vector<1x1xf32> to vector<1x1x1xf32>
    %cst_9 = arith.constant 1.562500e-02 : f32
    %15 = vector.broadcast %cst_9 : f32 to vector<1x1x1xf32>
    %16 = arith.mulf %14, %15 : vector<1x1x1xf32>
    %cst_10 = arith.constant 1.000000e-16 : f32
    %17 = vector.broadcast %cst_10 : f32 to vector<1x1x1xf32>
    %18 = arith.addf %16, %17 : vector<1x1x1xf32>
    %19 = math.rsqrt %18 : vector<1x1x1xf32>
    %c0_11 = arith.constant 0 : index
    %c0_12 = arith.constant 0 : index
    %20 = vector.load %arg2[%c0_11, %c0_12] : memref<4x1xf32, #tpu.memory_space<vmem>>, vector<4x1xf32>
    %21 = vector.shape_cast %20 : vector<4x1xf32> to vector<1x4x1xf32>
    %c0_13 = arith.constant 0 : index
    %c0_14 = arith.constant 0 : index
    %22 = vector.load %arg3[%c0_13, %c0_14] : memref<4x1xf32, #tpu.memory_space<vmem>>, vector<4x1xf32>
    %23 = vector.shape_cast %22 : vector<4x1xf32> to vector<1x4x1xf32>
    %24 = vector.broadcast %19 : vector<1x1x1xf32> to vector<1x4x1xf32>
    %25 = arith.mulf %21, %24 : vector<1x4x1xf32>
    %26 = vector.broadcast %6 : vector<1x1x1xf32> to vector<1x4x1xf32>
    %27 = arith.mulf %26, %25 : vector<1x4x1xf32>
    %28 = arith.subf %23, %27 : vector<1x4x1xf32>
    %c0_15 = arith.constant 0 : index
    %c0_16 = arith.constant 0 : index
    %c0_17 = arith.constant 0 : index
    %29 = vector.load %arg1[%c0_15, %c0_16, %c0_17] : memref<1x4x16xf32, #tpu.memory_space<vmem>>, vector<1x4x16xf32>
    %30 = vector.broadcast %25 : vector<1x4x1xf32> to vector<1x4x16xf32>
    %31 = arith.mulf %29, %30 : vector<1x4x16xf32>
    %32 = vector.broadcast %28 : vector<1x4x1xf32> to vector<1x4x16xf32>
    %33 = arith.addf %31, %32 : vector<1x4x16xf32>
    %c0_18 = arith.constant 0 : index
    %c0_19 = arith.constant 0 : index
    %c0_20 = arith.constant 0 : index
    %34 = vector.load %arg4[%c0_18, %c0_19, %c0_20] : memref<1x4x16xf32, #tpu.memory_space<vmem>>, vector<1x4x16xf32>
    tpu.vector_store %arg4[%c0_18, %c0_19, %c0_20], %33 {strides = array<i32>} : memref<1x4x16xf32, #tpu.memory_space<vmem>>, vector<1x4x16xf32>,
    return
  }
  func.func @transform_0(%arg0: i32) -> (i32, i32, i32) {
    %c0_i32 = arith.constant 0 : i32
    %c0_i32_0 = arith.constant 0 : i32
    %c0_i32_1 = arith.constant 0 : i32
    return %arg0, %c0_i32, %c0_i32_0 : i32, i32, i32
  }
  func.func @transform_1(%arg0: i32) -> (i32, i32) {
    %c0_i32 = arith.constant 0 : i32
    %c0_i32_0 = arith.constant 0 : i32
    %c0_i32_1 = arith.constant 0 : i32
    return %c0_i32, %c0_i32_0 : i32, i32
  }
  func.func @transform_2(%arg0: i32) -> (i32, i32) {
    %c0_i32 = arith.constant 0 : i32
    %c0_i32_0 = arith.constant 0 : i32
    %c0_i32_1 = arith.constant 0 : i32
    return %c0_i32, %c0_i32_0 : i32, i32
  }
  func.func @transform_3(%arg0: i32) -> (i32, i32, i32) {
    %c0_i32 = arith.constant 0 : i32
    %c0_i32_0 = arith.constant 0 : i32
    %c0_i32_1 = arith.constant 0 : i32
    return %arg0, %c0_i32, %c0_i32_0 : i32, i32, i32
  }
}

</mosaic_0001>

<llo_original>
// kernel: tpu_custom_call.1
$region0: #{tpu_custom_call.1}
  #allocation0 [shape = 'u32[]', space=smem, size = 0x4, offset = 0x4, fixed_abs, tag = 'smem constant byte address 0x4 - core index']
  #allocation1 [shape = 'u32[144,128]{1,0:T(1,128)}', space=vmem, size = 0x12000, scoped, tag = 'internal scratch']
  %s0 = inlined_call_operand.vmem [shape: f32[2,4,16], index: 0, kind: input, shape index: {}]
  %s1 = inlined_call_operand.vmem [shape: f32[4,1], index: 1, kind: input, shape index: {}]
  %s2 = inlined_call_operand.vmem [shape: f32[4,1], index: 2, kind: input, shape index: {}]
  %s3 = inlined_call_operand.hbm [shape: f32[2,4,16], index: 3, kind: output, shape index: {}]
  %s4 = sld [smem:[#allocation0]]
  $region45: #{tpu_custom_call.1} parent=0
    _
  %s6 = ssub.s32 1, %s4
  %s7 = scalar_select 0, %s6, %s4
  $region1: #{tpu_custom_call.1} parent=0
    #allocation2 [shape = 'u8[4096]{0}', space=vmem, size = 0x1000, scoped, tag = 'output window, operand 0']
    #allocation3 [shape = 's32[2]{0}', space=sflag, size = 0x8, scoped, tag = 'scoped memory for tpu_custom_call.1']
    %8 = vsyncpa [#allocation3], 0
    %s9 = scalar_lea.sflag [#allocation3], 1
    %10 = vsyncpa %s9, 0
    loop: start=0, step=1, limit=4
    $region2: #{tpu_custom_call.1} parent=1 // loop_pre_header
      _
    $region3: #{tpu_custom_call.1} parent=1 // loop_header
      %s12 = sphi 0, %s16
      %p13 = scmp.ge.s32.totalorder %s12, 4
      %s22 = sphi 0, %s24
      %s25 = sphi 0, %s22
      %s26 = sphi 0, %s25
      %s42 = sphi 0, %s26
      %s46 = sphi 0, %s46
      %s48 = sphi 0, %s46
      %s49 = sphi 0, %s48
      %s63 = sphi 0, %s49
      %s67 = sphi 0, %s67
      %s69 = sphi 0, %s67
      %s70 = sphi 0, %s69
      %s84 = sphi 0, %s70
      %s90 = sphi 0, %s92
      %s93 = sphi 0, %s90
      %s94 = sphi 0, %s93
      %s110 = sphi 0, %s94
    $region4: #{tpu_custom_call.1} parent=1 // loop_header_branch
      %15 = sbr.rel (%p13) target = $region8
    $region5: #{tpu_custom_call.1} parent=1 // loop_body
      %s17 = ssub.s32 %s12, 1
      %s18 = ssub.s32 %s12, 2
      %s19 = sadd.s32 %s12, 1
      %s20 = ssub.s32 %s12, %s19
      %p21 = scmp.eq.s32.totalorder %s20, 0
      %s23 = sadd.s32 %s22, 1
      %s24 = scalar_select %p21, %s22, %s23
      %p27 = pneg %p21
      %p28 = scmp.eq.s32.totalorder %s12, 1
      %p29 = por %p27, %p28
      %p30 = scmp.ne.s32.totalorder %s22, %s25
      %p31 = scmp.eq.s32.totalorder %s12, 0
      %p32 = por %p30, %p31
      %p33 = scmp.ne.s32.totalorder %s22, %s25
      %p34 = scmp.eq.s32.totalorder %s17, 1
      %p35 = por %p33, %p34
      %p36 = scmp.ne.s32.totalorder %s25, %s26
      %p37 = scmp.eq.s32.totalorder %s17, 0
      %p38 = por %p36, %p37
      %p39 = scmp.ne.s32.totalorder %s25, %s26
      %p40 = scmp.eq.s32.totalorder %s18, 1
      %p41 = por %p39, %p40
      %p43 = scmp.ne.s32.totalorder %s26, %s42
      %p44 = scmp.eq.s32.totalorder %s18, 0
      %p45 = por %p43, %p44
      %s47 = sadd.s32 %s46, 1
      %p50 = scmp.eq.s32.totalorder %s12, 1
      %p51 = scmp.ne.s32.totalorder %s46, %s48
      %p52 = scmp.eq.s32.totalorder %s12, 0
      %p53 = por %p51, %p52
      %p54 = scmp.ne.s32.totalorder %s46, %s48
      %p55 = scmp.eq.s32.totalorder %s17, 1
      %p56 = por %p54, %p55
      %p57 = scmp.ne.s32.totalorder %s48, %s49
      %p58 = scmp.eq.s32.totalorder %s17, 0
      %p59 = por %p57, %p58
      %p60 = scmp.ne.s32.totalorder %s48, %s49
      %p61 = scmp.eq.s32.totalorder %s18, 1
      %p62 = por %p60, %p61
      %p64 = scmp.ne.s32.totalorder %s49, %s63
      %p65 = scmp.eq.s32.totalorder %s18, 0
      %p66 = por %p64, %p65
      %s68 = sadd.s32 %s67, 1
      %p71 = scmp.eq.s32.totalorder %s12, 1
      %p72 = scmp.ne.s32.totalorder %s67, %s69
      %p73 = scmp.eq.s32.totalorder %s12, 0
      %p74 = por %p72, %p73
      %p75 = scmp.ne.s32.totalorder %s67, %s69
      %p76 = scmp.eq.s32.totalorder %s17, 1
      %p77 = por %p75, %p76
      %p78 = scmp.ne.s32.totalorder %s69, %s70
      %p79 = scmp.eq.s32.totalorder %s17, 0
      %p80 = por %p78, %p79
      %p81 = scmp.ne.s32.totalorder %s69, %s70
      %p82 = scmp.eq.s32.totalorder %s18, 1
      %p83 = por %p81, %p82
      %p85 = scmp.ne.s32.totalorder %s70, %s84
      %p86 = scmp.eq.s32.totalorder %s18, 0
      %p87 = por %p85, %p86
      %s88 = ssub.s32 %s12, %s19
      %p89 = scmp.eq.s32.totalorder %s88, 0
      %s91 = sadd.s32 %s90, 1
      %s92 = scalar_select %p89, %s90, %s91
      %p95 = pneg %p89
      %p96 = scmp.eq.s32.totalorder %s12, 1
      %p97 = por %p95, %p96
      %p98 = scmp.ne.s32.totalorder %s90, %s93
      %p99 = scmp.eq.s32.totalorder %s12, 0
      %p100 = por %p98, %p99
      %p101 = scmp.ne.s32.totalorder %s90, %s93
      %p102 = scmp.eq.s32.totalorder %s17, 1
      %p103 = por %p101, %p102
      %p104 = scmp.ne.s32.totalorder %s93, %s94
      %p105 = scmp.eq.s32.totalorder %s17, 0
      %p106 = por %p104, %p105
      %p107 = scmp.ne.s32.totalorder %s93, %s94
      %p108 = scmp.eq.s32.totalorder %s18, 1
      %p109 = por %p107, %p108
      %p111 = scmp.ne.s32.totalorder %s94, %s110
      %p112 = scmp.eq.s32.totalorder %s18, 0
      %p113 = por %p111, %p112
      %p114 = scmp.le.s32.totalorder 1, %s12
      %p115 = scmp.lt.s32.totalorder %s12, 3
      %p116 = pnand %p114, %p115
      %p117 = pneg %p116
      // Predicated region
      $region9: #{tpu_custom_call.1} parent=5 // pred_check
        _
      $region10: #{tpu_custom_call.1} parent=5 // pred_check_branch
        %119 = sbr.rel (%p116) target = $region12
      $region11: #{tpu_custom_call.1} parent=5 // pred_region
        %s120 = ssub.s32 %s12, 1
        // Predicated region
        $region13: #{tpu_custom_call.1} parent=11 // pred_check
          %p121 = pneg %p59
        $region14: #{tpu_custom_call.1} parent=11 // pred_check_branch
          %123 = sbr.rel (%p121) target = $region16
        $region15: #{tpu_custom_call.1} parent=11 // pred_region
          _
        $region16: #{tpu_custom_call.1} parent=11 // pred_fallthru
          _
        // Predicated region
        $region17: #{tpu_custom_call.1} parent=11 // pred_check
          %p124 = pneg %p80
        $region18: #{tpu_custom_call.1} parent=11 // pred_check_branch
          %126 = sbr.rel (%p124) target = $region20
        $region19: #{tpu_custom_call.1} parent=11 // pred_region
          _
        $region20: #{tpu_custom_call.1} parent=11 // pred_fallthru
          _
      $region12: #{tpu_custom_call.1} parent=5 // pred_fallthru
        _
      %p127 = scmp.lt.s32.totalorder %s12, 2
      // Predicated region
      $region21: #{tpu_custom_call.1} parent=5 // pred_check
        %p128 = pneg %p127
      $region22: #{tpu_custom_call.1} parent=5 // pred_check_branch
        %130 = sbr.rel (%p128) target = $region24
      $region23: #{tpu_custom_call.1} parent=5 // pred_region
        // Predicated region
        $region25: #{tpu_custom_call.1} parent=23 // pred_check
          %p131 = pneg %p32
        $region26: #{tpu_custom_call.1} parent=23 // pred_check_branch
          %133 = sbr.rel (%p131) target = $region28
        $region27: #{tpu_custom_call.1} parent=23 // pred_region
          %p134 = scmp.lt.s32.totalorder %s12, 1
          %s135 = scalar_select %p134, %s12, 1
          %s136 = smul.addr %s135, 4
          %s137 = scalar_lea.vmem %s0, %s136
        $region28: #{tpu_custom_call.1} parent=23 // pred_fallthru
          _
      $region24: #{tpu_custom_call.1} parent=5 // pred_fallthru
        _
      %p138 = scmp.le.s32.totalorder 1, %s12
      %p139 = scmp.lt.s32.totalorder %s12, 3
      %p140 = pnand %p138, %p139
      %p141 = pneg %p140
      // Predicated region
      $region29: #{tpu_custom_call.1} parent=5 // pred_check
        _
      $region30: #{tpu_custom_call.1} parent=5 // pred_check_branch
        %143 = sbr.rel (%p140) target = $region32
      $region31: #{tpu_custom_call.1} parent=5 // pred_region
        %s144 = ssub.s32 %s12, 1
        %p145 = scmp.lt.s32.totalorder %s17, 1
        %s146 = scalar_select %p145, %s17, 1
        %s147 = smul.addr %s146, 4
        %s148 = scalar_lea.vmem %s0, %s147
        %p149 = pneg %p38
        %p150 = pneg %p35
        %p151 = pneg %p59
        %p152 = pneg %p56
        %p153 = pneg %p80
        %p154 = pneg %p77
        %p155 = pneg %p106
        %p156 = pneg %p103
        %s157 = sand.u32 %s93, 1
        %s158 = scalar_lea.sflag [#allocation3], %s157
        %s159 = sand.u32 %s93, 1
        %s160 = smul.addr %s159, 4
        %s161 = scalar_lea.vmem [#allocation2], %s160
        %p162 = scmp.lt.s32.totalorder %s17, 1
        %s163 = scalar_select %p162, %s17, 1
        %s164 = smul.addr %s163, 4
        %s165 = scalar_lea.vmem %s0, %s164
        %v166 = vld [vmem:[%s165] sm:$0xf]
        %vm167 = vcmask 125952
        %v168 = vsel %vm167, %v166, 0.0
        %169 = vadd.xlane.f32.xlu0 %v168
        %v170 = vpop.xlane.xlu0 %169
        %vm171 = vcmask 1043456
        %v172 = vsel %vm171, %v170, 0.0
        %v173 = vrot.slane %v172, 4
        %v174 = vadd.f32 %v172, %v173
        %v175 = vrot.slane %v174, 2
        %v176 = vadd.f32 %v174, %v175
        %v177 = vrot.slane %v176, 1
        %v178 = vadd.f32 %v176, %v177
        %v179 = vmul.f32 %v178, 0.015625
        %v180 = vsub.f32 %v166, %v179
        %v181 = vmul.f32 %v180, %v180
        %v182 = vsel %vm167, %v181, 0.0
        %183 = vadd.xlane.f32.xlu0 %v182
        %v184 = vpop.xlane.xlu0 %183
        %v185 = vsel %vm171, %v184, 0.0
        %v186 = vrot.slane %v185, 4
        %v187 = vadd.f32 %v185, %v186
        %v188 = vrot.slane %v187, 2
        %v189 = vadd.f32 %v187, %v188
        %v190 = vrot.slane %v189, 1
        %v191 = vadd.f32 %v189, %v190
        %v192 = vmul.f32 %v191, 0.015625
        %v193 = vadd.f32 %v192, 1e-16
        %v194 = vrsqrt.pop %v193
        %v195 = vld [vmem:[%s1] sm:$0xf]
        %v196 = vld [vmem:[%s2] sm:$0xf]
        %v197 = vmul.f32 %v195, %v194
        %v198 = vmul.f32 %v179, %v197
        %v199 = vsub.f32 %v196, %v198
        %201 = vset.pattern.permute.xlu0 0
        %202 = vperm.xlu0 %201, %v197
        %v203 = vpop.permute.xlu0 %202
        %v205 = vmul.f32 %v166, %v203
        %207 = vset.pattern.permute.xlu0 0
        %208 = vperm.xlu0 %207, %v199
        %v209 = vpop.permute.xlu0 %208
        %v211 = vadd.f32 %v205, %v209
        %212 = vst.msk [vmem:[%s161] sm:$0xf] %vm167, %v211
        %s213 = sand.u32 %s93, 1
        %s214 = scalar_lea.sflag [#allocation3], %s213
        %s215 = sand.u32 %s93, 1
        %s216 = smul.addr %s215, 4
        %s217 = scalar_lea.vmem [#allocation2], %s216
        // Predicated region
        $region33: #{tpu_custom_call.1} parent=31 // pred_check
          %p218 = pneg %p103
        $region34: #{tpu_custom_call.1} parent=31 // pred_check_branch
          %220 = sbr.rel (%p218) target = $region36
        $region35: #{tpu_custom_call.1} parent=31 // pred_region
          %s222 = ssub.s32 64, 64
          %223 = vsyncadd %s214, %s222
          %s224 = smul.addr %s17, 64
          %s225 = scalar_lea.hbm %s3, %s224
          %s227 = sshll.u32 %s217, 4
          %s228 = int_to_ptr.vmem [resolvable:$true] %s227
          %230 = dma.vmem_to_hbm [thread:$0]  %s228, 64, %s225, %s214
        $region36: #{tpu_custom_call.1} parent=31 // pred_fallthru
          _
      $region32: #{tpu_custom_call.1} parent=5 // pred_fallthru
        _
      %p231 = scmp.le.s32.totalorder 2, %s12
      // Predicated region
      $region37: #{tpu_custom_call.1} parent=5 // pred_check
        %p232 = pneg %p231
      $region38: #{tpu_custom_call.1} parent=5 // pred_check_branch
        %234 = sbr.rel (%p232) target = $region40
      $region39: #{tpu_custom_call.1} parent=5 // pred_region
        %s235 = ssub.s32 %s12, 2
        // Predicated region
        $region41: #{tpu_custom_call.1} parent=39 // pred_check
          %p236 = pneg %p109
        $region42: #{tpu_custom_call.1} parent=39 // pred_check_branch
          %238 = sbr.rel (%p236) target = $region44
        $region43: #{tpu_custom_call.1} parent=39 // pred_region
          %s239 = sand.u32 %s94, 1
          %s240 = scalar_lea.sflag [#allocation3], %s239
          %s241 = sand.u32 %s94, 1
          %s242 = smul.addr %s241, 4
          %s243 = scalar_lea.vmem [#allocation2], %s242
          %244 = dma.done %s240, 64
        $region44: #{tpu_custom_call.1} parent=39 // pred_fallthru
          _
      $region40: #{tpu_custom_call.1} parent=5 // pred_fallthru
        _
    $region6: #{tpu_custom_call.1} parent=1 // loop_footer
      %s16 = sadd.s32 1, %s12
    $region7: #{tpu_custom_call.1} parent=1 // loop_footer_branch
      %11 = sbr.rel target = $region3
    $region8: #{tpu_custom_call.1} parent=1 // loop_exit
      _
    %245 = vsyncpa [#allocation3], 1
    %s246 = scalar_lea.sflag [#allocation3], 1
    %247 = vsyncpa %s246, 1

</llo_original>
